<compile_context>
chip_gen: v6e
topology: v6e:2x2x1
jax: 0.10.0
libtpu: 0.0.40
codegen_flags: <defaults>
</compile_context>

<pallas_src>
import functools

import jax
import jax.numpy as jnp
from jax.experimental import pallas as pl
from jax.experimental.pallas import tpu as pltpu


# ----------------------------------------------------------------------------
# Tiling helpers
# ----------------------------------------------------------------------------
def _round_up(x, m):
    return ((x + m - 1) // m) * m


def _round_down(x, m):
    return (x // m) * m


def _vmem_budget_bytes():
    """Generation-aware working-set budget (v7x has only 64 MiB per TC)."""
    try:
        info = pltpu.get_tpu_info()
        cap = int(getattr(info, "vmem_capacity_bytes", 64 * 1024 * 1024))
    except Exception:
        cap = 64 * 1024 * 1024          # assume the smallest (v7x per-TC)
    return min(cap // 2, 48 * 1024 * 1024)


_HARD_TILE_CAP = 8192                   # lanes; keeps unroll/trace size sane


def _choose_tile(n, c):
    """Pick a lane tile (multiple of 128) and the grid size.

    The tile is sized from the VMEM budget (2x-buffered input block + live f32
    temporaries, counting padded sublanes), capped, then adjusted so there are
    at least two (and preferably an even number of) grid steps: >=2 steps keep
    the DMA pipeline busy, and an even count balances v7x's two TensorCores
    (no cost on v5e/v6e's single core).
    """
    budget = _vmem_budget_bytes()
    c_pad = _round_up(max(c, 1), 8)     # sublanes actually occupied per vreg
    # per-lane bytes: 2x-buffered (V=3, c_pad) f32 input block, ~6 live
    # (c_pad, T) f32 temporaries, 2x-buffered per-sample output row.
    per_lane = (2 * 3 * c_pad + 6 * c_pad + 2) * 4
    n128 = _round_up(n, 128)
    tile_cap = max(128, _round_down(budget // per_lane, 128))
    tile = min(tile_cap, _HARD_TILE_CAP, n128)
    num_tiles = -(-n // tile)
    if num_tiles == 1 and n128 >= 256:
        tile = _round_up(n128 // 2, 128)
        num_tiles = -(-n // tile)
    elif num_tiles > 1 and num_tiles % 2 == 1:
        tile = _round_up(-(-n128 // (num_tiles + 1)), 128)
        num_tiles = -(-n // tile)
    return tile, num_tiles


# ----------------------------------------------------------------------------
# Pallas kernel: per-sample cross-entropy (view 0) + per-sample jsdv1_3 across
# the views, plus per-128-lane partial sums of both. Inputs arrive as a single
# (num_views, C, tile_n) block (classes on sublanes, samples on lanes).
# ----------------------------------------------------------------------------
def _ce_jsd_kernel(x_ref, lab_ref, ce_ref, part_ref, *, ignore_index, n_valid,
                   tile_n):
    num_views = x_ref.shape[0]
    c = x_ref.shape[1]
    t = tile_n
    inv_v = jnp.float32(1.0 / num_views)

    lab = lab_ref[...]                                       # (1, T) int32
    cls_idx = jax.lax.broadcasted_iota(jnp.int32, (c, t), 0)

    nll = None
    p_sum = None          # (C, T): sum_v softmax_v
    plogp_sum = None      # (1, T): sum_v sum_c p_v * log p_v
    for v in range(num_views):                               # static unroll
        x = x_ref[v].astype(jnp.float32)                     # (C, T)
        z = x - jnp.max(x, axis=0, keepdims=True)
        e = jnp.exp(z)                                       # one exp per view
        s = jnp.sum(e, axis=0, keepdims=True)                # (1, T)
        logp = z - jnp.log(s)                                # (C, T)
        p = e * (1.0 / s)                                    # exact divide
        plogp = jnp.sum(p * logp, axis=0, keepdims=True)     # (1, T)
        if v == 0:
            # F.cross_entropy(pred_orig, label, reduction='none', ignore_index)
            one_hot = cls_idx == lab
            valid = (lab >= 0) & (lab != ignore_index) & (lab < c)
            # TODO(synk): labels >= C contribute 0 instead of raising like torch.
            nll_raw = -jnp.sum(jnp.where(one_hot, logp, 0.0), axis=0,
                               keepdims=True)
            nll = jnp.where(valid, nll_raw, 0.0)             # (1, T)
            p_sum, plogp_sum = p, plogp
        else:
            p_sum = p_sum + p
            plogp_sum = plogp_sum + plogp

    # jsdv1_3: (1/V) * sum_v KL(p_v || m), m = clamp(mean_v p_v, 1e-7, 1).
    # sum_v p_v*(logp_v - logm) = plogp_sum - p_sum * logm (upper clamp dead).
    logm = jnp.log(jnp.maximum(p_sum * inv_v, 1e-7))
    jsd = (plogp_sum - jnp.sum(p_sum * logm, axis=0, keepdims=True)) * inv_v

    # Ragged-tail mask: the score tensor is NOT padded host-side, so the last
    # tile's out-of-range lanes hold garbage.
    col = pl.program_id(0) * t + jax.lax.broadcasted_iota(jnp.int32, (1, t), 1)
    lane_ok = col < n_valid
    nll = jnp.where(lane_ok, nll, 0.0)
    jsd = jnp.where(lane_ok, jsd, 0.0)

    ce_ref[...] = nll[None]                                  # (1, 1, T), lane-dense

    # Per-128-lane partial sums via lane-aligned slices (no relayout), so the
    # JAX epilogue reduces num_tiles*128 values instead of N.
    def fold(row):                                           # (1, T) -> (1, 128)
        acc = row[:, 0:128]
        for i in range(1, t // 128):
            acc = acc + row[:, i * 128:(i + 1) * 128]
        return acc

    part_ref[0, 0:1, :] = fold(nll)
    part_ref[0, 1:2, :] = fold(jsd)


def ce_jsd_pallas(cls_score, label, *, num_views=3, ignore_index=-100):
    """Returns (per-sample CE of view 0 (n,), sum of CE, sum of JSD)."""
    assert num_views == 3, "kernel is specialized for jsdv1_3 (3 views)"
    total, c = cls_score.shape
    n = total // num_views
    # TODO(synk): rows beyond num_views * n (non-divisible inputs) are dropped,
    # matching torch.chunk on evenly stacked views.
    views = cls_score[: num_views * n].reshape(num_views, n, c)
    # Class-on-sublane / sample-on-lane layout: single wrapper HBM pass; the
    # ragged tail is handled inside the kernel (no host-side pad of the scores).
    views_t = jnp.transpose(views, (0, 2, 1))                # (V, C, N)

    tile_n, num_tiles = _choose_tile(n, c)
    n_lab = num_tiles * tile_n
    lab = label[:n].astype(jnp.int32)
    lab = jnp.pad(lab, (0, n_lab - n), constant_values=ignore_index)
    lab = lab.reshape(1, n_lab)
    # TODO(synk): each distinct n retraces/recompiles the pallas_call; bucket n
    # upstream if the loss sees many distinct sizes per training step.

    kernel = functools.partial(_ce_jsd_kernel, ignore_index=ignore_index,
                               n_valid=n, tile_n=tile_n)
    in_bytes = views_t.size * views_t.dtype.itemsize + lab.size * 4
    cost = pl.CostEstimate(
        flops=int(24 * num_views * n * c),
        transcendentals=int(n * (num_views * c + c + num_views)),
        bytes_accessed=int(in_bytes + num_tiles * tile_n * 4
                           + num_tiles * 2 * 128 * 4),
    )

    ce, part = pl.pallas_call(
        kernel,
        grid=(num_tiles,),
        in_specs=[
            pl.BlockSpec((num_views, c, tile_n), lambda i: (0, 0, i)),
            pl.BlockSpec((1, tile_n), lambda i: (0, i)),
        ],
        out_specs=[
            pl.BlockSpec((1, 1, tile_n), lambda i: (i, 0, 0)),
            pl.BlockSpec((1, 2, 128), lambda i: (i, 0, 0)),
        ],
        out_shape=[
            jax.ShapeDtypeStruct((num_tiles, 1, tile_n), jnp.float32),
            jax.ShapeDtypeStruct((num_tiles, 2, 128), jnp.float32),
        ],
        compiler_params=pltpu.CompilerParams(
            dimension_semantics=("parallel",),
            vmem_limit_bytes=_vmem_budget_bytes(),
        ),
        cost_estimate=cost,
    )(views_t, lab)

    ce_per = ce.reshape(-1)[:n]
    nll_sum = jnp.sum(part[:, 0, :])
    jsd_sum = jnp.sum(part[:, 1, :])
    return ce_per, nll_sum, jsd_sum


# ----------------------------------------------------------------------------
# mmdet-style reduction glue (plain JAX)
# ----------------------------------------------------------------------------
def weight_reduce_loss(loss, weight=None, reduction='mean', avg_factor=None):
    if weight is not None:
        loss = loss * weight
    if avg_factor is None:
        if reduction == 'mean':
            loss = jnp.mean(loss)
        elif reduction == 'sum':
            loss = jnp.sum(loss)
    else:
        if reduction == 'mean':
            loss = jnp.sum(loss) / avg_factor
        elif reduction != 'none':
            raise ValueError('avg_factor can not be used with reduction="sum"')
    return loss


class CrossEntropyLossPlus:
    """JAX/Pallas port of mmdet CrossEntropyLossPlus (softmax CE + jsdv1_3)."""

    def __init__(self, use_sigmoid=False, use_mask=False, reduction='mean',
                 class_weight=None, ignore_index=None, loss_weight=1.0,
                 additional_loss='jsdv1_3', additional_loss_weight_reduce=False,
                 lambda_weight=0.0001, num_views=3, avg='1.0', **kwargs):
        assert use_sigmoid is False and use_mask is False   # softmax CE path
        assert class_weight is None  # TODO(synk): per-class weighting not wired
        self.reduction = reduction
        self.loss_weight = loss_weight
        self.ignore_index = ignore_index
        self.additional_loss = additional_loss
        self.additional_loss_weight_reduce = additional_loss_weight_reduce
        self.lambda_weight = lambda_weight
        self.num_views = num_views
        self.avg = avg

    def __call__(self, cls_score, label, weight=None, avg_factor=None,
                 reduction_override=None, ignore_index=None, **kwargs):
        assert reduction_override in (None, 'none', 'mean', 'sum')
        reduction = reduction_override if reduction_override else self.reduction
        if ignore_index is None:
            ignore_index = self.ignore_index
        ignore_index = -100 if ignore_index is None else ignore_index

        n = cls_score.shape[0] // self.num_views
        ce_per, nll_sum, jsd_sum = ce_jsd_pallas(
            cls_score, label,
            num_views=self.num_views, ignore_index=ignore_index)

        # cross_entropy(): avg='1.1' divides avg_factor by num_views.
        ce_avg_factor = kwargs.get('original_avg_factor', avg_factor)
        if self.avg == '1.1' and ce_avg_factor is not None:
            ce_avg_factor = ce_avg_factor / self.num_views

        if weight is None and reduction in ('mean', 'sum'):
            # Fast path: use the in-kernel per-tile partial sums.
            if reduction == 'mean':
                loss_cls_red = (nll_sum / n if ce_avg_factor is None
                                else nll_sum / ce_avg_factor)
            else:
                if ce_avg_factor is not None:
                    raise ValueError(
                        'avg_factor can not be used with reduction="sum"')
                loss_cls_red = nll_sum
        else:
            w = (None if weight is None
                 else jnp.asarray(weight)[:n].astype(jnp.float32))
            loss_cls_red = weight_reduce_loss(
                ce_per, w, reduction=reduction, avg_factor=ce_avg_factor)
        loss_cls = self.loss_weight * loss_cls_red

        loss_additional = 0.0
        if self.additional_loss == 'jsdv1_3':
            # jsdv1_3: sum over samples / len(p_aug1) == 1 -> scalar; weight is
            # dropped when additional_loss_weight_reduce is False.
            loss_add = jsd_sum
            w_add = None
            if self.additional_loss_weight_reduce and weight is not None:
                w_add = jnp.asarray(weight)[:n].astype(jnp.float32)
            loss_additional = weight_reduce_loss(
                loss_add, w_add, reduction=reduction, avg_factor=avg_factor)

        return loss_cls + self.lambda_weight * loss_additional


# ----------------------------------------------------------------------------
# Pure-JAX reference (sanity check against the Pallas result)
# ----------------------------------------------------------------------------
def _reference_loss(cls_score, label, lambda_weight, num_views=3,
                    ignore_index=-100):
    total, c = cls_score.shape
    n = total // num_views
    views = cls_score[: num_views * n].reshape(num_views, n, c)
    views = views.astype(jnp.float32)
    lab = label[:n]

    logp = jax.nn.log_softmax(views, axis=-1)
    nll = -jnp.take_along_axis(logp[0], lab[:, None], axis=-1)[:, 0]
    nll = jnp.where((lab != ignore_index) & (lab >= 0), nll, 0.0)
    loss_cls = jnp.mean(nll)

    p = jax.nn.softmax(views, axis=-1)
    pm = jnp.clip(jnp.mean(p, axis=0), 1e-7, 1.0)
    logm = jnp.log(pm)
    kl = jnp.sum(p * (jnp.log(p) - logm[None]), axis=-1)   # (V, N)
    jsd = jnp.sum(jnp.mean(kl, axis=0))
    return loss_cls + lambda_weight * jsd


if __name__ == "__main__":
    loss_mod = CrossEntropyLossPlus(
        reduction='mean', loss_weight=1.0,
        additional_loss='jsdv1_3', lambda_weight=1e-4, num_views=3)

    # (n_per_view, num_classes): single-tile tiny case and a 2-tile ragged case.
    for n_per_view, num_classes in ((8, 9), (300, 9)):
        key = jax.random.PRNGKey(0)
        k1, k2 = jax.random.split(key)
        cls_score = jax.random.normal(
            k1, (3 * n_per_view, num_classes), jnp.float32) * 2.0
        label = jax.random.randint(
            k2, (3 * n_per_view,), 0, num_classes, dtype=jnp.int32)

        loss = loss_mod(cls_score, label, weight=None, avg_factor=None)
        loss = jax.block_until_ready(loss)

        ref = _reference_loss(cls_score, label, lambda_weight=1e-4)
        assert jnp.allclose(loss, ref, rtol=1e-5, atol=1e-5), (
            n_per_view, loss, ref)

    print("KERNEL_OK")
</pallas_src>

<mosaic_0001>
module attributes {stable_mosaic.version = 11 : i64} {
  func.func @_ce_jsd_kernel(%arg0: i32, %arg1: memref<3x9x128xf32, #tpu.memory_space<vmem>>, %arg2: memref<1x128xi32, #tpu.memory_space<vmem>>, %arg3: memref<1x1x128xf32, #tpu.memory_space<vmem>>, %arg4: memref<1x2x128xf32, #tpu.memory_space<vmem>>) attributes {dimension_semantics = [#tpu.dimension_semantics<parallel>], iteration_bounds = array<i64: 1>, scalar_prefetch = 0 : i64, scratch_operands = 0 : i64, tpu.core_type = #tpu.core_type<tc>, window_params = [{transform_indices = @transform_0, window_bounds = array<i64: 3, 9, 128>}, {transform_indices = @transform_1, window_bounds = array<i64: 1, 128>}, {transform_indices = @transform_2, window_bounds = array<i64: 1, 1, 128>}, {transform_indices = @transform_3, window_bounds = array<i64: 1, 2, 128>}]} {
    %c0 = arith.constant 0 : index
    %c0_0 = arith.constant 0 : index
    %0 = vector.load %arg2[%c0, %c0_0] : memref<1x128xi32, #tpu.memory_space<vmem>>, vector<1x128xi32>
    %1 = tpu.iota {dimensions = array<i32: 0>} : vector<9x128xi32>
    %c0_1 = arith.constant 0 : index
    %c0_2 = arith.constant 0 : index
    %c0_3 = arith.constant 0 : index
    %2 = vector.load %arg1[%c0_1, %c0_2, %c0_3] : memref<3x9x128xf32, #tpu.memory_space<vmem>>, vector<1x9x128xf32>
    %3 = vector.shape_cast %2 : vector<1x9x128xf32> to vector<9x128xf32>
    %cst = arith.constant dense<0xFF800000> : vector<128xf32>
    %4 = vector.multi_reduction <maximumf>, %3, %cst [0] : vector<9x128xf32> to vector<128xf32>
    %5 = vector.shape_cast %4 : vector<128xf32> to vector<1x128xf32>
    %6 = vector.broadcast %5 : vector<1x128xf32> to vector<9x128xf32>
    %7 = arith.subf %3, %6 : vector<9x128xf32>
    %8 = math.exp %7 : vector<9x128xf32>
    %cst_4 = arith.constant dense<0.000000e+00> : vector<128xf32>
    %9 = vector.multi_reduction <add>, %8, %cst_4 [0] : vector<9x128xf32> to vector<128xf32>
    %10 = vector.shape_cast %9 : vector<128xf32> to vector<1x128xf32>
    %11 = math.log %10 : vector<1x128xf32>
    %12 = vector.broadcast %11 : vector<1x128xf32> to vector<9x128xf32>
    %13 = arith.subf %7, %12 : vector<9x128xf32>
    %cst_5 = arith.constant 1.000000e+00 : f32
    %14 = vector.broadcast %cst_5 : f32 to vector<1x128xf32>
    %15 = arith.divf %14, %10 : vector<1x128xf32>
    %16 = vector.broadcast %15 : vector<1x128xf32> to vector<9x128xf32>
    %17 = arith.mulf %8, %16 : vector<9x128xf32>
    %18 = arith.mulf %17, %13 : vector<9x128xf32>
    %cst_6 = arith.constant dense<0.000000e+00> : vector<128xf32>
    %19 = vector.multi_reduction <add>, %18, %cst_6 [0] : vector<9x128xf32> to vector<128xf32>
    %20 = vector.shape_cast %19 : vector<128xf32> to vector<1x128xf32>
    %21 = vector.broadcast %0 : vector<1x128xi32> to vector<9x128xi32>
    %22 = arith.cmpi eq, %1, %21 : vector<9x128xi32>
    %c0_i32 = arith.constant 0 : i32
    %23 = vector.broadcast %c0_i32 : i32 to vector<1x128xi32>
    %24 = arith.cmpi sge, %0, %23 : vector<1x128xi32>
    %c-100_i32 = arith.constant -100 : i32
    %25 = vector.broadcast %c-100_i32 : i32 to vector<1x128xi32>
    %26 = arith.cmpi ne, %0, %25 : vector<1x128xi32>
    %27 = arith.andi %24, %26 : vector<1x128xi1>
    %c9_i32 = arith.constant 9 : i32
    %28 = vector.broadcast %c9_i32 : i32 to vector<1x128xi32>
    %29 = arith.cmpi slt, %0, %28 : vector<1x128xi32>
    %30 = arith.andi %27, %29 : vector<1x128xi1>
    %cst_7 = arith.constant 0.000000e+00 : f32
    %31 = vector.broadcast %cst_7 : f32 to vector<9x128xf32>
    %32 = arith.select %22, %13, %31 : vector<9x128xi1>, vector<9x128xf32>
    %cst_8 = arith.constant dense<0.000000e+00> : vector<128xf32>
    %33 = vector.multi_reduction <add>, %32, %cst_8 [0] : vector<9x128xf32> to vector<128xf32>
    %34 = vector.shape_cast %33 : vector<128xf32> to vector<1x128xf32>
    %cst_9 = arith.constant 0.000000e+00 : f32
    %35 = vector.broadcast %cst_9 : f32 to vector<1x128xf32>
    %36 = arith.subf %35, %34 : vector<1x128xf32>
    %cst_10 = arith.constant 0.000000e+00 : f32
    %37 = vector.broadcast %cst_10 : f32 to vector<1x128xf32>
    %38 = arith.select %30, %36, %37 : vector<1x128xi1>, vector<1x128xf32>
    %c1 = arith.constant 1 : index
    %c0_11 = arith.constant 0 : index
    %c0_12 = arith.constant 0 : index
    %39 = vector.load %arg1[%c1, %c0_11, %c0_12] : memref<3x9x128xf32, #tpu.memory_space<vmem>>, vector<1x9x128xf32>
    %40 = vector.shape_cast %39 : vector<1x9x128xf32> to vector<9x128xf32>
    %cst_13 = arith.constant dense<0xFF800000> : vector<128xf32>
    %41 = vector.multi_reduction <maximumf>, %40, %cst_13 [0] : vector<9x128xf32> to vector<128xf32>
    %42 = vector.shape_cast %41 : vector<128xf32> to vector<1x128xf32>
    %43 = vector.broadcast %42 : vector<1x128xf32> to vector<9x128xf32>
    %44 = arith.subf %40, %43 : vector<9x128xf32>
    %45 = math.exp %44 : vector<9x128xf32>
    %cst_14 = arith.constant dense<0.000000e+00> : vector<128xf32>
    %46 = vector.multi_reduction <add>, %45, %cst_14 [0] : vector<9x128xf32> to vector<128xf32>
    %47 = vector.shape_cast %46 : vector<128xf32> to vector<1x128xf32>
    %48 = math.log %47 : vector<1x128xf32>
    %49 = vector.broadcast %48 : vector<1x128xf32> to vector<9x128xf32>
    %50 = arith.subf %44, %49 : vector<9x128xf32>
    %cst_15 = arith.constant 1.000000e+00 : f32
    %51 = vector.broadcast %cst_15 : f32 to vector<1x128xf32>
    %52 = arith.divf %51, %47 : vector<1x128xf32>
    %53 = vector.broadcast %52 : vector<1x128xf32> to vector<9x128xf32>
    %54 = arith.mulf %45, %53 : vector<9x128xf32>
    %55 = arith.mulf %54, %50 : vector<9x128xf32>
    %cst_16 = arith.constant dense<0.000000e+00> : vector<128xf32>
    %56 = vector.multi_reduction <add>, %55, %cst_16 [0] : vector<9x128xf32> to vector<128xf32>
    %57 = vector.shape_cast %56 : vector<128xf32> to vector<1x128xf32>
    %58 = arith.addf %17, %54 : vector<9x128xf32>
    %59 = arith.addf %20, %57 : vector<1x128xf32>
    %c2 = arith.constant 2 : index
    %c0_17 = arith.constant 0 : index
    %c0_18 = arith.constant 0 : index
    %60 = vector.load %arg1[%c2, %c0_17, %c0_18] : memref<3x9x128xf32, #tpu.memory_space<vmem>>, vector<1x9x128xf32>
    %61 = vector.shape_cast %60 : vector<1x9x128xf32> to vector<9x128xf32>
    %cst_19 = arith.constant dense<0xFF800000> : vector<128xf32>
    %62 = vector.multi_reduction <maximumf>, %61, %cst_19 [0] : vector<9x128xf32> to vector<128xf32>
    %63 = vector.shape_cast %62 : vector<128xf32> to vector<1x128xf32>
    %64 = vector.broadcast %63 : vector<1x128xf32> to vector<9x128xf32>
    %65 = arith.subf %61, %64 : vector<9x128xf32>
    %66 = math.exp %65 : vector<9x128xf32>
    %cst_20 = arith.constant dense<0.000000e+00> : vector<128xf32>
    %67 = vector.multi_reduction <add>, %66, %cst_20 [0] : vector<9x128xf32> to vector<128xf32>
    %68 = vector.shape_cast %67 : vector<128xf32> to vector<1x128xf32>
    %69 = math.log %68 : vector<1x128xf32>
    %70 = vector.broadcast %69 : vector<1x128xf32> to vector<9x128xf32>
    %71 = arith.subf %65, %70 : vector<9x128xf32>
    %cst_21 = arith.constant 1.000000e+00 : f32
    %72 = vector.broadcast %cst_21 : f32 to vector<1x128xf32>
    %73 = arith.divf %72, %68 : vector<1x128xf32>
    %74 = vector.broadcast %73 : vector<1x128xf32> to vector<9x128xf32>
    %75 = arith.mulf %66, %74 : vector<9x128xf32>
    %76 = arith.mulf %75, %71 : vector<9x128xf32>
    %cst_22 = arith.constant dense<0.000000e+00> : vector<128xf32>
    %77 = vector.multi_reduction <add>, %76, %cst_22 [0] : vector<9x128xf32> to vector<128xf32>
    %78 = vector.shape_cast %77 : vector<128xf32> to vector<1x128xf32>
    %79 = arith.addf %58, %75 : vector<9x128xf32>
    %80 = arith.addf %59, %78 : vector<1x128xf32>
    %cst_23 = arith.constant 0.333333343 : f32
    %81 = vector.broadcast %cst_23 : f32 to vector<9x128xf32>
    %82 = arith.mulf %79, %81 : vector<9x128xf32>
    %cst_24 = arith.constant 1.000000e-07 : f32
    %83 = vector.broadcast %cst_24 : f32 to vector<9x128xf32>
    %84 = arith.maximumf %82, %83 : vector<9x128xf32>
    %85 = math.log %84 : vector<9x128xf32>
    %86 = arith.mulf %79, %85 : vector<9x128xf32>
    %cst_25 = arith.constant dense<0.000000e+00> : vector<128xf32>
    %87 = vector.multi_reduction <add>, %86, %cst_25 [0] : vector<9x128xf32> to vector<128xf32>
    %88 = vector.shape_cast %87 : vector<128xf32> to vector<1x128xf32>
    %89 = arith.subf %80, %88 : vector<1x128xf32>
    %cst_26 = arith.constant 0.333333343 : f32
    %90 = vector.broadcast %cst_26 : f32 to vector<1x128xf32>
    %91 = arith.mulf %89, %90 : vector<1x128xf32>
    %c128_i32 = arith.constant 128 : i32
    %92 = arith.muli %arg0, %c128_i32 : i32
    %93 = tpu.iota {dimensions = array<i32: 1>} : vector<1x128xi32>
    %94 = vector.broadcast %92 : i32 to vector<1x128xi32>
    %95 = arith.addi %94, %93 : vector<1x128xi32>
    %c8_i32 = arith.constant 8 : i32
    %96 = vector.broadcast %c8_i32 : i32 to vector<1x128xi32>
    %97 = arith.cmpi slt, %95, %96 : vector<1x128xi32>
    %cst_27 = arith.constant 0.000000e+00 : f32
    %98 = vector.broadcast %cst_27 : f32 to vector<1x128xf32>
    %99 = arith.select %97, %38, %98 : vector<1x128xi1>, vector<1x128xf32>
    %cst_28 = arith.constant 0.000000e+00 : f32
    %100 = vector.broadcast %cst_28 : f32 to vector<1x128xf32>
    %101 = arith.select %97, %91, %100 : vector<1x128xi1>, vector<1x128xf32>
    %102 = vector.shape_cast %99 : vector<1x128xf32> to vector<1x1x128xf32>
    %c0_29 = arith.constant 0 : index
    %c0_30 = arith.constant 0 : index
    %c0_31 = arith.constant 0 : index
    %103 = vector.load %arg3[%c0_29, %c0_30, %c0_31] : memref<1x1x128xf32, #tpu.memory_space<vmem>>, vector<1x1x128xf32>
    tpu.vector_store %arg3[%c0_29, %c0_30, %c0_31], %102 {strides = array<i32>} : memref<1x1x128xf32, #tpu.memory_space<vmem>>, vector<1x1x128xf32>,
    %c0_32 = arith.constant 0 : index
    %c0_33 = arith.constant 0 : index
    %c0_34 = arith.constant 0 : index
    %104 = vector.load %arg4[%c0_32, %c0_33, %c0_34] : memref<1x2x128xf32, #tpu.memory_space<vmem>>, vector<1x1x128xf32>
    %105 = vector.shape_cast %104 : vector<1x1x128xf32> to vector<1x128xf32>
    %106 = vector.shape_cast %99 : vector<1x128xf32> to vector<1x1x128xf32>
    tpu.vector_store %arg4[%c0_32, %c0_33, %c0_34], %106 {strides = array<i32>} : memref<1x2x128xf32, #tpu.memory_space<vmem>>, vector<1x1x128xf32>,
    %c0_35 = arith.constant 0 : index
    %c1_36 = arith.constant 1 : index
    %c0_37 = arith.constant 0 : index
    %107 = vector.load %arg4[%c0_35, %c1_36, %c0_37] : memref<1x2x128xf32, #tpu.memory_space<vmem>>, vector<1x1x128xf32>
    %108 = vector.shape_cast %107 : vector<1x1x128xf32> to vector<1x128xf32>
    %109 = vector.shape_cast %101 : vector<1x128xf32> to vector<1x1x128xf32>
    tpu.vector_store %arg4[%c0_35, %c1_36, %c0_37], %109 {strides = array<i32>} : memref<1x2x128xf32, #tpu.memory_space<vmem>>, vector<1x1x128xf32>,
    return
  }
  func.func @transform_0(%arg0: i32) -> (i32, i32, i32) {
    %c0_i32 = arith.constant 0 : i32
    %c0_i32_0 = arith.constant 0 : i32
    %c0_i32_1 = arith.constant 0 : i32
    return %c0_i32, %c0_i32_0, %arg0 : i32, i32, i32
  }
  func.func @transform_1(%arg0: i32) -> (i32, i32) {
    %c0_i32 = arith.constant 0 : i32
    %c0_i32_0 = arith.constant 0 : i32
    return %c0_i32, %arg0 : i32, i32
  }
  func.func @transform_2(%arg0: i32) -> (i32, i32, i32) {
    %c0_i32 = arith.constant 0 : i32
    %c0_i32_0 = arith.constant 0 : i32
    %c0_i32_1 = arith.constant 0 : i32
    return %arg0, %c0_i32, %c0_i32_0 : i32, i32, i32
  }
  func.func @transform_3(%arg0: i32) -> (i32, i32, i32) {
    %c0_i32 = arith.constant 0 : i32
    %c0_i32_0 = arith.constant 0 : i32
    %c0_i32_1 = arith.constant 0 : i32
    return %arg0, %c0_i32, %c0_i32_0 : i32, i32, i32
  }
}

</mosaic_0001>

<llo_original>
// kernel: tpu_custom_call.1
$region0: #{tpu_custom_call.1}
  #allocation0 [shape = 'u32[]', space=smem, size = 0x4, offset = 0x4, fixed_abs, tag = 'smem constant byte address 0x4 - core index']
  #allocation1 [shape = 'u32[144,128]{1,0:T(1,128)}', space=vmem, size = 0x12000, scoped, tag = 'internal scratch']
  %s0 = inlined_call_operand.vmem [shape: f32[3,9,8], index: 0, kind: input, shape index: {}]
  %s1 = inlined_call_operand.vmem [shape: s32[1,128], index: 1, kind: input, shape index: {}]
  %s2 = inlined_call_operand.hbm [shape: f32[1,1,128], index: 2, kind: output, shape index: {0}]
  %s3 = inlined_call_operand.hbm [shape: f32[1,2,128], index: 3, kind: output, shape index: {1}]
  %4 = xla_tuple %s2, %s3
  %s5 = sld [smem:[#allocation0]]
  $region26: #{tpu_custom_call.1} parent=0
    _
  %s7 = ssub.s32 1, %s5
  %s8 = scalar_select 0, %s7, %s5
  $region1: #{tpu_custom_call.1} parent=0
    #allocation2 [shape = 'u8[512]{0}', space=vmem, size = 0x400, scoped, tag = 'output window, operand 0, single buffered']
    #allocation3 [shape = 's32[1]{0}', space=sflag, size = 0x4, scoped, tag = 'scoped memory for tpu_custom_call.1']
    #allocation4 [shape = 'u8[1024]{0}', space=vmem, size = 0x400, scoped, tag = 'output window, operand 1, single buffered']
    #allocation5 [shape = 's32[1]{0}', space=sflag, size = 0x4, scoped, tag = 'scoped memory for tpu_custom_call.1']
    %9 = vsyncpa [#allocation3], 0
    %10 = vsyncpa [#allocation5], 0
    // Predicated region
    $region2: #{tpu_custom_call.1} parent=1 // pred_check
      _
    $region3: #{tpu_custom_call.1} parent=1 // pred_check_branch
      %12 = sbr.rel (0) target = $region5
    $region4: #{tpu_custom_call.1} parent=1 // pred_region
      _
    $region5: #{tpu_custom_call.1} parent=1 // pred_fallthru
      _
    // Predicated region
    $region6: #{tpu_custom_call.1} parent=1 // pred_check
      _
    $region7: #{tpu_custom_call.1} parent=1 // pred_check_branch
      %14 = sbr.rel (0) target = $region9
    $region8: #{tpu_custom_call.1} parent=1 // pred_region
      _
    $region9: #{tpu_custom_call.1} parent=1 // pred_fallthru
      _
    %v15 = vld [vmem:[%s1] sm:$0x1]
    %v16 = vlaneseq
    %v17 = vshrl.u32 %v16, 7
    %v18 = vadd.s32 %v17, 8
    %v19 = vld [vmem:[%s0] sm:$0xff]
    %v20 = vld [vmem:[%s0 + $0x8] sm:$0x1]
    %vm21 = vcmask 1040384
    %v22 = vsel %vm21, %v20, -inf
    %v23 = vmax.f32 %v19, %v22
    %v24 = vrot.slane %v23, 4
    %v25 = vmax.f32 %v23, %v24
    %v26 = vrot.slane %v25, 2
    %v27 = vmax.f32 %v25, %v26
    %v28 = vrot.slane %v27, 1
    %v29 = vmax.f32 %v27, %v28
    %v30 = vsub.f32 %v19, %v29
    %v31 = vsub.f32 %v20, %v29
    %v32 = vmul.f32 %v30, 1.442695
    %v33 = vpow.pop %v32
    %v34 = vmul.f32 %v31, 1.442695
    %v35 = vpow.pop %v34
    %v36 = vsel %vm21, %v35, 0.0
    %v37 = vadd.f32 %v33, %v36
    %v38 = vrot.slane %v37, 4
    %v39 = vadd.f32 %v37, %v38
    %v40 = vrot.slane %v39, 2
    %v41 = vadd.f32 %v39, %v40
    %v42 = vrot.slane %v41, 1
    %v43 = vadd.f32 %v41, %v42
    %v44 = vlog2.pop %v43
    %v45 = vmul.f32 %v44, 0.6931472
    %v46 = vsub.f32 %v30, %v45
    %v47 = vsub.f32 %v31, %v45
    %v48 = vrcp.pop %v43
    %v49 = vmul.f32 1.0, %v48
    %v50 = vmul.f32 %v33, %v49
    %v51 = vmul.f32 %v35, %v49
    %v52 = vmul.f32 %v50, %v46
    %v53 = vmul.f32 %v51, %v47
    %v54 = vsel %vm21, %v53, 0.0
    %v55 = vadd.f32 %v52, %v54
    %v56 = vrot.slane %v55, 4
    %v57 = vadd.f32 %v55, %v56
    %v58 = vrot.slane %v57, 2
    %v59 = vadd.f32 %v57, %v58
    %v60 = vrot.slane %v59, 1
    %v61 = vadd.f32 %v59, %v60
    %v62 = vlaneseq
    %v63 = vshrl.u32 %v62, 7
    %v64 = vsub.s32 0, %v63
    %v65 = vrot.slane %v15, %v64
    %vm66 = vcmp.eq.s32.totalorder %v17, %v65
    %vm67 = vcmp.eq.s32.totalorder %v18, %v65
    %vm68 = vcmp.ge.s32.totalorder %v15, 0
    %vm69 = vcmp.ne.s32.totalorder %v15, 4294967196
    %vm70 = vmand %vm68, %vm69
    %vm71 = vcmp.lt.s32.totalorder %v15, 9
    %vm72 = vmand %vm70, %vm71
    %v73 = vsel %vm66, %v46, 0.0
    %v74 = vsel %vm67, %v47, 0.0
    %v75 = vsel %vm21, %v74, 0.0
    %v76 = vadd.f32 %v73, %v75
    %v77 = vrot.slane %v76, 4
    %v78 = vadd.f32 %v76, %v77
    %v79 = vrot.slane %v78, 2
    %v80 = vadd.f32 %v78, %v79
    %v81 = vrot.slane %v80, 1
    %v82 = vadd.f32 %v80, %v81
    %v83 = vsub.f32 0.0, %v82
    %v84 = vsel %vm72, %v83, 0.0
    %s85 = scalar_lea.vmem %s0, 16
    %v86 = vld [vmem:[%s85] sm:$0xff]
    %v87 = vld [vmem:[%s85 + $0x8] sm:$0x1]
    %v88 = vsel %vm21, %v87, -inf
    %v89 = vmax.f32 %v86, %v88
    %v90 = vrot.slane %v89, 4
    %v91 = vmax.f32 %v89, %v90
    %v92 = vrot.slane %v91, 2
    %v93 = vmax.f32 %v91, %v92
    %v94 = vrot.slane %v93, 1
    %v95 = vmax.f32 %v93, %v94
    %v96 = vsub.f32 %v86, %v95
    %v97 = vsub.f32 %v87, %v95
    %v98 = vmul.f32 %v96, 1.442695
    %v99 = vpow.pop %v98
    %v100 = vmul.f32 %v97, 1.442695
    %v101 = vpow.pop %v100
    %v102 = vsel %vm21, %v101, 0.0
    %v103 = vadd.f32 %v99, %v102
    %v104 = vrot.slane %v103, 4
    %v105 = vadd.f32 %v103, %v104
    %v106 = vrot.slane %v105, 2
    %v107 = vadd.f32 %v105, %v106
    %v108 = vrot.slane %v107, 1
    %v109 = vadd.f32 %v107, %v108
    %v110 = vlog2.pop %v109
    %v111 = vmul.f32 %v110, 0.6931472
    %v112 = vsub.f32 %v96, %v111
    %v113 = vsub.f32 %v97, %v111
    %v114 = vrcp.pop %v109
    %v115 = vmul.f32 1.0, %v114
    %v116 = vmul.f32 %v99, %v115
    %v117 = vmul.f32 %v101, %v115
    %v118 = vmul.f32 %v116, %v112
    %v119 = vmul.f32 %v117, %v113
    %v120 = vsel %vm21, %v119, 0.0
    %v121 = vadd.f32 %v118, %v120
    %v122 = vrot.slane %v121, 4
    %v123 = vadd.f32 %v121, %v122
    %v124 = vrot.slane %v123, 2
    %v125 = vadd.f32 %v123, %v124
    %v126 = vrot.slane %v125, 1
    %v127 = vadd.f32 %v125, %v126
    %v128 = vadd.f32 %v50, %v116
    %v129 = vadd.f32 %v51, %v117
    %v130 = vadd.f32 %v61, %v127
    %s131 = scalar_lea.vmem %s0, 32
    %v132 = vld [vmem:[%s131] sm:$0xff]
    %v133 = vld [vmem:[%s131 + $0x8] sm:$0x1]
    %v134 = vsel %vm21, %v133, -inf
    %v135 = vmax.f32 %v132, %v134
    %v136 = vrot.slane %v135, 4
    %v137 = vmax.f32 %v135, %v136
    %v138 = vrot.slane %v137, 2
    %v139 = vmax.f32 %v137, %v138
    %v140 = vrot.slane %v139, 1
    %v141 = vmax.f32 %v139, %v140
    %v142 = vsub.f32 %v132, %v141
    %v143 = vsub.f32 %v133, %v141
    %v144 = vmul.f32 %v142, 1.442695
    %v145 = vpow.pop %v144
    %v146 = vmul.f32 %v143, 1.442695
    %v147 = vpow.pop %v146
    %v148 = vsel %vm21, %v147, 0.0
    %v149 = vadd.f32 %v145, %v148
    %v150 = vrot.slane %v149, 4
    %v151 = vadd.f32 %v149, %v150
    %v152 = vrot.slane %v151, 2
    %v153 = vadd.f32 %v151, %v152
    %v154 = vrot.slane %v153, 1
    %v155 = vadd.f32 %v153, %v154
    %v156 = vlog2.pop %v155
    %v157 = vmul.f32 %v156, 0.6931472
    %v158 = vsub.f32 %v142, %v157
    %v159 = vsub.f32 %v143, %v157
    %v160 = vrcp.pop %v155
    %v161 = vmul.f32 1.0, %v160
    %v162 = vmul.f32 %v145, %v161
    %v163 = vmul.f32 %v147, %v161
    %v164 = vmul.f32 %v162, %v158
    %v165 = vmul.f32 %v163, %v159
    %v166 = vsel %vm21, %v165, 0.0
    %v167 = vadd.f32 %v164, %v166
    %v168 = vrot.slane %v167, 4
    %v169 = vadd.f32 %v167, %v168
    %v170 = vrot.slane %v169, 2
    %v171 = vadd.f32 %v169, %v170
    %v172 = vrot.slane %v171, 1
    %v173 = vadd.f32 %v171, %v172
    %v174 = vadd.f32 %v128, %v162
    %v175 = vadd.f32 %v129, %v163
    %v176 = vadd.f32 %v130, %v173
    %v177 = vmul.f32 %v174, 0.33333334
    %v178 = vmul.f32 %v175, 0.33333334
    %v179 = vmax.f32 %v177, 1e-07
    %v180 = vmax.f32 %v178, 1e-07
    %v181 = vlog2.pop %v179
    %v182 = vmul.f32 %v181, 0.6931472
    %v183 = vlog2.pop %v180
    %v184 = vmul.f32 %v183, 0.6931472
    %v185 = vmul.f32 %v174, %v182
    %v186 = vmul.f32 %v175, %v184
    %v187 = vsel %vm21, %v186, 0.0
    %v188 = vadd.f32 %v185, %v187
    %v189 = vrot.slane %v188, 4
    %v190 = vadd.f32 %v188, %v189
    %v191 = vrot.slane %v190, 2
    %v192 = vadd.f32 %v190, %v191
    %v193 = vrot.slane %v192, 1
    %v194 = vadd.f32 %v192, %v193
    %v195 = vsub.f32 %v176, %v194
    %v196 = vmul.f32 %v195, 0.33333334
    %s197 = smul.u32 0, 128
    %v198 = vlaneseq
    %v199 = vand.u32 %v198, 127
    %v200 = vstv %s197
    %v201 = vadd.s32 %v200, %v199
    %vm202 = vcmp.lt.s32.totalorder %v201, 8
    %v203 = vsel %vm202, %v84, 0.0
    %v204 = vsel %vm202, %v196, 0.0
    %205 = vst [vmem:[#allocation2] sm:$0x1] %v203
    %206 = vst [vmem:[#allocation4] sm:$0x1] %v203
    %207 = vst [vmem:[#allocation4 + $0x1] sm:$0x1] %v204
    // Predicated region
    $region10: #{tpu_custom_call.1} parent=1 // pred_check
      _
    $region11: #{tpu_custom_call.1} parent=1 // pred_check_branch
      %209 = sbr.rel (0) target = $region13
    $region12: #{tpu_custom_call.1} parent=1 // pred_region
      %s211 = ssub.s32 16, 16
      %212 = vsyncadd [#allocation3], %s211
      %s214 = sshll.u32 [#allocation2], 4
      %s215 = int_to_ptr.vmem [resolvable:$true] %s214
      %217 = dma.vmem_to_hbm [thread:$0]  %s215, 16, %s2, [#allocation3]
    $region13: #{tpu_custom_call.1} parent=1 // pred_fallthru
      _
    // Predicated region
    $region14: #{tpu_custom_call.1} parent=1 // pred_check
      _
    $region15: #{tpu_custom_call.1} parent=1 // pred_check_branch
      %219 = sbr.rel (0) target = $region17
    $region16: #{tpu_custom_call.1} parent=1 // pred_region
      %s221 = ssub.s32 32, 32
      %222 = vsyncadd [#allocation5], %s221
      %s224 = sshll.u32 [#allocation4], 4
      %s225 = int_to_ptr.vmem [resolvable:$true] %s224
      %227 = dma.vmem_to_hbm [thread:$0]  %s225, 32, %s3, [#allocation5]
    $region17: #{tpu_custom_call.1} parent=1 // pred_fallthru
      _
    // Predicated region
    $region18: #{tpu_custom_call.1} parent=1 // pred_check
      _
    $region19: #{tpu_custom_call.1} parent=1 // pred_check_branch
      %229 = sbr.rel (0) target = $region21
    $region20: #{tpu_custom_call.1} parent=1 // pred_region
      %230 = dma.done [#allocation3], 16
    $region21: #{tpu_custom_call.1} parent=1 // pred_fallthru
      _
    // Predicated region
    $region22: #{tpu_custom_call.1} parent=1 // pred_check
      _
    $region23: #{tpu_custom_call.1} parent=1 // pred_check_branch
      %232 = sbr.rel (0) target = $region25
    $region24: #{tpu_custom_call.1} parent=1 // pred_region
      %233 = dma.done [#allocation5], 32
    $region25: #{tpu_custom_call.1} parent=1 // pred_fallthru
      _
    %234 = vsyncpa [#allocation3], 1
    %235 = vsyncpa [#allocation5], 1

</llo_original>
